<compile_context>
chip_gen: v5e
topology: v5e:2x2
jax: 0.10.0
libtpu: 0.0.40
codegen_flags: <defaults>
</compile_context>

<pallas_src>
import functools
import math

import jax
import jax.numpy as jnp
from jax.experimental import pallas as pl
from jax.experimental.pallas import tpu as pltpu

INV_SQRT2 = 1.0 / math.sqrt(2.0)


def _channel_matmul_f32(w, x, use_vpu):
    """w:(Npyr,Nx) @ x:(Nx,tl) -> (Npyr,tl), f32 accumulate."""
    if use_vpu:
        # Tiny Nx/Npyr: an MXU call would use <1% of the array and pay push/pop
        # latency every grid step; do broadcast MACs on the VPU instead
        # (L stays the lane dim, pure streaming).
        nx = w.shape[1]
        acc = w[:, 0][:, None] * x[0][None, :]
        for k in range(1, nx):
            acc = acc + w[:, k][:, None] * x[k][None, :]
        return acc
    return jnp.dot(w, x, preferred_element_type=jnp.float32)


def _conv1x1_kernel(x_ref, w_ref, b_ref, o_ref, *, use_vpu):
    # x_ref: (1, Nx, tl), w_ref: (Npyr, Nx), b_ref: (Npyr, 1), o_ref: (1, Npyr, tl)
    x = x_ref[0].astype(jnp.float32)
    w = w_ref[...].astype(jnp.float32)
    y = _channel_matmul_f32(w, x, use_vpu) + b_ref[...].astype(jnp.float32)
    o_ref[0] = y.astype(o_ref.dtype)


def _combiner_sum_kernel(x_ref, w_ref, b_ref, pyr_ref, o_ref, *, use_vpu):
    # Same as above, fused with (pyr + y) / sqrt(2) in f32 before the final cast.
    x = x_ref[0].astype(jnp.float32)
    w = w_ref[...].astype(jnp.float32)
    y = _channel_matmul_f32(w, x, use_vpu) + b_ref[...].astype(jnp.float32)
    o_ref[0] = ((pyr_ref[0].astype(jnp.float32) + y) * INV_SQRT2).astype(o_ref.dtype)


def _pick_tile_l(L, nx, npyr, itemsize, budget_bytes=10 * 1024 * 1024, cap=4096):
    """Largest L-tile that (a) divides L or equals L, (b) is 128-aligned when
    tiled, (c) keeps double-buffered x/pyr/out blocks within a conservative
    VMEM budget (fits v5e's 16 MiB scoped default)."""
    per_col = 2 * itemsize * (nx + 2 * npyr)  # 2x-buffered x + pyr + out per L column
    max_cols = max(128, budget_bytes // max(per_col, 1))
    cap = min(cap, int(max_cols))
    if L <= cap:
        return L
    t = (cap // 128) * 128
    while t >= 128:
        if L % t == 0:
            return t
        t -= 128
    # TODO(synk): ragged last tile (mask/pad) instead of a whole-row fallback.
    return L


def combiner_up(pyr, x, weight, bias):
    """CombinerUp.forward with mode='sum'.

    pyr   : (B, Npyr, Lp) or None      (NCL, like PyTorch; Lp >= L)
    x     : (B, Nx, L)                 (NCL, like PyTorch)
    weight: (Npyr, Nx, 1)              (Conv1d weight layout)
    bias  : (Npyr,)
    returns (B, Npyr, L) in x.dtype
    """
    B, Nx, L = x.shape
    Npyr = weight.shape[0]
    out_dtype = x.dtype

    w2 = weight[:, :, 0]          # (Npyr, Nx) -- already oriented for w @ x (NCL)
    b2 = bias.reshape(Npyr, 1)    # lane-broadcast inside the kernel

    tl = _pick_tile_l(L, Nx, Npyr, jnp.dtype(out_dtype).itemsize)
    assert L % tl == 0
    grid = (B, L // tl)

    x_spec = pl.BlockSpec((1, Nx, tl), lambda b, j: (b, 0, j))
    w_spec = pl.BlockSpec((Npyr, Nx), lambda b, j: (0, 0))      # resident, not re-DMA'd
    b_spec = pl.BlockSpec((Npyr, 1), lambda b, j: (0, 0))
    out_spec = pl.BlockSpec((1, Npyr, tl), lambda b, j: (b, 0, j))

    cp = pltpu.CompilerParams(dimension_semantics=("parallel", "parallel"))

    # Tiny channel counts -> VPU MAC path; otherwise MXU dot.
    use_vpu = (Nx * Npyr) <= 1024

    if pyr is None:
        return pl.pallas_call(
            functools.partial(_conv1x1_kernel, use_vpu=use_vpu),
            out_shape=jax.ShapeDtypeStruct((B, Npyr, L), out_dtype),
            grid=grid,
            in_specs=[x_spec, w_spec, b_spec],
            out_specs=out_spec,
            compiler_params=cp,
        )(x, w2, b2)

    Lp = pyr.shape[-1]
    # pyr[..., :L] is handled purely by the index_map (block j reads columns
    # [j*tl, j*tl+tl) <= L <= Lp) whenever the tile is lane-aligned; otherwise
    # fall back to a wrapper slice so the block equals the full array dims.
    if tl % 128 == 0 or tl == Lp:
        pyr_in = pyr
    else:
        pyr_in = pyr[..., :L]
    pyr_spec = pl.BlockSpec((1, Npyr, tl), lambda b, j: (b, 0, j))

    return pl.pallas_call(
        functools.partial(_combiner_sum_kernel, use_vpu=use_vpu),
        out_shape=jax.ShapeDtypeStruct((B, Npyr, L), out_dtype),
        grid=grid,
        in_specs=[x_spec, w_spec, b_spec, pyr_spec],
        out_specs=out_spec,
        compiler_params=cp,
    )(x, w2, b2, pyr_in)


def _reference(pyr, x, weight, bias):
    # Pure-JAX reference of the PyTorch forward (f32 math).
    y = jnp.einsum(
        "oi,bil->bol",
        weight[:, :, 0].astype(jnp.float32),
        x.astype(jnp.float32),
        precision=jax.lax.Precision.HIGHEST,
    ) + bias.astype(jnp.float32)[None, :, None]
    if pyr is None:
        return y
    return (pyr[..., : x.shape[-1]].astype(jnp.float32) + y) * INV_SQRT2


if __name__ == "__main__":
    key = jax.random.PRNGKey(0)
    k1, k2, k3, k4, k5, k6, k7, k8 = jax.random.split(key, 8)

    # ---- Case 1: typical small CombinerUp shapes, pyr longer than x (VPU path,
    # pyr[..., :L] handled by the index_map, lane-dense 256-wide output tiles).
    B, Nx, Npyr, L, Lp = 2, 8, 4, 256, 320
    x = jax.random.normal(k1, (B, Nx, L), dtype=jnp.float32)
    pyr = jax.random.normal(k2, (B, Npyr, Lp), dtype=jnp.float32)
    # NOTE: the module zero-inits the conv weight; use a random weight here so the
    # matmul path is actually exercised numerically (semantics are init-independent).
    weight = jax.random.normal(k3, (Npyr, Nx, 1), dtype=jnp.float32) * 0.1
    bound = 1.0 / math.sqrt(Nx)
    bias = jax.random.uniform(k4, (Npyr,), minval=-bound, maxval=bound, dtype=jnp.float32)

    out = jax.block_until_ready(combiner_up(pyr, x, weight, bias))
    ref = _reference(pyr, x, weight, bias)
    assert out.shape == (B, Npyr, L)
    assert jnp.allclose(out, ref, atol=1e-5, rtol=1e-5)

    # ---- Case 2: pyr is None path.
    out_none = jax.block_until_ready(combiner_up(None, x, weight, bias))
    ref_none = _reference(None, x, weight, bias)
    assert jnp.allclose(out_none, ref_none, atol=1e-5, rtol=1e-5)

    # ---- Case 3: L not 128-aligned and Lp > L (wrapper-slice fallback for pyr).
    L3, Lp3 = 96, 100
    x3 = jax.random.normal(k5, (B, Nx, L3), dtype=jnp.float32)
    pyr3 = jax.random.normal(k6, (B, Npyr, Lp3), dtype=jnp.float32)
    out3 = jax.block_until_ready(combiner_up(pyr3, x3, weight, bias))
    ref3 = _reference(pyr3, x3, weight, bias)
    assert jnp.allclose(out3, ref3, atol=1e-5, rtol=1e-5)

    # ---- Case 4: larger channel counts -> MXU dot path.
    Nx4, Npyr4, L4 = 256, 128, 256
    x4 = jax.random.normal(k7, (B, Nx4, L4), dtype=jnp.float32)
    pyr4 = jax.random.normal(k8, (B, Npyr4, L4), dtype=jnp.float32)
    w4 = jax.random.normal(k3, (Npyr4, Nx4, 1), dtype=jnp.float32) * (1.0 / math.sqrt(Nx4))
    b4 = jax.random.uniform(k4, (Npyr4,), minval=-0.1, maxval=0.1, dtype=jnp.float32)
    out4 = jax.block_until_ready(combiner_up(pyr4, x4, w4, b4))
    ref4 = _reference(pyr4, x4, w4, b4)
    assert jnp.allclose(out4, ref4, atol=1e-3, rtol=1e-3)

    print("KERNEL_OK")
</pallas_src>

<mosaic_0001>
module attributes {stable_mosaic.version = 11 : i64} {
  func.func @_combiner_sum_kernel(%arg0: i32, %arg1: i32, %arg2: memref<1x8x256xf32, #tpu.memory_space<vmem>>, %arg3: memref<4x8xf32, #tpu.memory_space<vmem>>, %arg4: memref<4x1xf32, #tpu.memory_space<vmem>>, %arg5: memref<1x4x256xf32, #tpu.memory_space<vmem>>, %arg6: memref<1x4x256xf32, #tpu.memory_space<vmem>>) attributes {dimension_semantics = [#tpu.dimension_semantics<parallel>, #tpu.dimension_semantics<parallel>], iteration_bounds = array<i64: 2, 1>, scalar_prefetch = 0 : i64, scratch_operands = 0 : i64, tpu.core_type = #tpu.core_type<tc>, window_params = [{transform_indices = @transform_0, window_bounds = array<i64: 1, 8, 256>}, {pipeline_mode = #tpu.pipeline_mode<synchronous>, transform_indices = @transform_1, window_bounds = array<i64: 4, 8>}, {pipeline_mode = #tpu.pipeline_mode<synchronous>, transform_indices = @transform_2, window_bounds = array<i64: 4, 1>}, {transform_indices = @transform_3, window_bounds = array<i64: 1, 4, 256>}, {transform_indices = @transform_4, window_bounds = array<i64: 1, 4, 256>}]} {
    %c0 = arith.constant 0 : index
    %c0_0 = arith.constant 0 : index
    %c0_1 = arith.constant 0 : index
    %0 = vector.load %arg2[%c0, %c0_0, %c0_1] : memref<1x8x256xf32, #tpu.memory_space<vmem>>, vector<1x8x256xf32>
    %1 = vector.shape_cast %0 : vector<1x8x256xf32> to vector<8x256xf32>
    %c0_2 = arith.constant 0 : index
    %c0_3 = arith.constant 0 : index
    %2 = vector.load %arg3[%c0_2, %c0_3] : memref<4x8xf32, #tpu.memory_space<vmem>>, vector<4x8xf32>
    %3 = vector.extract_strided_slice %2 {offsets = [0, 0], sizes = [4, 1], strides = [1, 1]} : vector<4x8xf32> to vector<4x1xf32>
    %4 = vector.shape_cast %3 : vector<4x1xf32> to vector<4xf32>
    %5 = vector.shape_cast %4 : vector<4xf32> to vector<4x1xf32>
    %6 = vector.extract_strided_slice %1 {offsets = [0, 0], sizes = [1, 256], strides = [1, 1]} : vector<8x256xf32> to vector<1x256xf32>
    %7 = vector.shape_cast %6 : vector<1x256xf32> to vector<256xf32>
    %8 = vector.shape_cast %7 : vector<256xf32> to vector<1x256xf32>
    %9 = vector.broadcast %5 : vector<4x1xf32> to vector<4x256xf32>
    %10 = vector.broadcast %8 : vector<1x256xf32> to vector<4x256xf32>
    %11 = arith.mulf %9, %10 : vector<4x256xf32>
    %12 = vector.extract_strided_slice %2 {offsets = [0, 1], sizes = [4, 1], strides = [1, 1]} : vector<4x8xf32> to vector<4x1xf32>
    %13 = vector.shape_cast %12 : vector<4x1xf32> to vector<4xf32>
    %14 = vector.shape_cast %13 : vector<4xf32> to vector<4x1xf32>
    %15 = vector.extract_strided_slice %1 {offsets = [1, 0], sizes = [1, 256], strides = [1, 1]} : vector<8x256xf32> to vector<1x256xf32>
    %16 = vector.shape_cast %15 : vector<1x256xf32> to vector<256xf32>
    %17 = vector.shape_cast %16 : vector<256xf32> to vector<1x256xf32>
    %18 = vector.broadcast %14 : vector<4x1xf32> to vector<4x256xf32>
    %19 = vector.broadcast %17 : vector<1x256xf32> to vector<4x256xf32>
    %20 = arith.mulf %18, %19 : vector<4x256xf32>
    %21 = arith.addf %11, %20 : vector<4x256xf32>
    %22 = vector.extract_strided_slice %2 {offsets = [0, 2], sizes = [4, 1], strides = [1, 1]} : vector<4x8xf32> to vector<4x1xf32>
    %23 = vector.shape_cast %22 : vector<4x1xf32> to vector<4xf32>
    %24 = vector.shape_cast %23 : vector<4xf32> to vector<4x1xf32>
    %25 = vector.extract_strided_slice %1 {offsets = [2, 0], sizes = [1, 256], strides = [1, 1]} : vector<8x256xf32> to vector<1x256xf32>
    %26 = vector.shape_cast %25 : vector<1x256xf32> to vector<256xf32>
    %27 = vector.shape_cast %26 : vector<256xf32> to vector<1x256xf32>
    %28 = vector.broadcast %24 : vector<4x1xf32> to vector<4x256xf32>
    %29 = vector.broadcast %27 : vector<1x256xf32> to vector<4x256xf32>
    %30 = arith.mulf %28, %29 : vector<4x256xf32>
    %31 = arith.addf %21, %30 : vector<4x256xf32>
    %32 = vector.extract_strided_slice %2 {offsets = [0, 3], sizes = [4, 1], strides = [1, 1]} : vector<4x8xf32> to vector<4x1xf32>
    %33 = vector.shape_cast %32 : vector<4x1xf32> to vector<4xf32>
    %34 = vector.shape_cast %33 : vector<4xf32> to vector<4x1xf32>
    %35 = vector.extract_strided_slice %1 {offsets = [3, 0], sizes = [1, 256], strides = [1, 1]} : vector<8x256xf32> to vector<1x256xf32>
    %36 = vector.shape_cast %35 : vector<1x256xf32> to vector<256xf32>
    %37 = vector.shape_cast %36 : vector<256xf32> to vector<1x256xf32>
    %38 = vector.broadcast %34 : vector<4x1xf32> to vector<4x256xf32>
    %39 = vector.broadcast %37 : vector<1x256xf32> to vector<4x256xf32>
    %40 = arith.mulf %38, %39 : vector<4x256xf32>
    %41 = arith.addf %31, %40 : vector<4x256xf32>
    %42 = vector.extract_strided_slice %2 {offsets = [0, 4], sizes = [4, 1], strides = [1, 1]} : vector<4x8xf32> to vector<4x1xf32>
    %43 = vector.shape_cast %42 : vector<4x1xf32> to vector<4xf32>
    %44 = vector.shape_cast %43 : vector<4xf32> to vector<4x1xf32>
    %45 = vector.extract_strided_slice %1 {offsets = [4, 0], sizes = [1, 256], strides = [1, 1]} : vector<8x256xf32> to vector<1x256xf32>
    %46 = vector.shape_cast %45 : vector<1x256xf32> to vector<256xf32>
    %47 = vector.shape_cast %46 : vector<256xf32> to vector<1x256xf32>
    %48 = vector.broadcast %44 : vector<4x1xf32> to vector<4x256xf32>
    %49 = vector.broadcast %47 : vector<1x256xf32> to vector<4x256xf32>
    %50 = arith.mulf %48, %49 : vector<4x256xf32>
    %51 = arith.addf %41, %50 : vector<4x256xf32>
    %52 = vector.extract_strided_slice %2 {offsets = [0, 5], sizes = [4, 1], strides = [1, 1]} : vector<4x8xf32> to vector<4x1xf32>
    %53 = vector.shape_cast %52 : vector<4x1xf32> to vector<4xf32>
    %54 = vector.shape_cast %53 : vector<4xf32> to vector<4x1xf32>
    %55 = vector.extract_strided_slice %1 {offsets = [5, 0], sizes = [1, 256], strides = [1, 1]} : vector<8x256xf32> to vector<1x256xf32>
    %56 = vector.shape_cast %55 : vector<1x256xf32> to vector<256xf32>
    %57 = vector.shape_cast %56 : vector<256xf32> to vector<1x256xf32>
    %58 = vector.broadcast %54 : vector<4x1xf32> to vector<4x256xf32>
    %59 = vector.broadcast %57 : vector<1x256xf32> to vector<4x256xf32>
    %60 = arith.mulf %58, %59 : vector<4x256xf32>
    %61 = arith.addf %51, %60 : vector<4x256xf32>
    %62 = vector.extract_strided_slice %2 {offsets = [0, 6], sizes = [4, 1], strides = [1, 1]} : vector<4x8xf32> to vector<4x1xf32>
    %63 = vector.shape_cast %62 : vector<4x1xf32> to vector<4xf32>
    %64 = vector.shape_cast %63 : vector<4xf32> to vector<4x1xf32>
    %65 = vector.extract_strided_slice %1 {offsets = [6, 0], sizes = [1, 256], strides = [1, 1]} : vector<8x256xf32> to vector<1x256xf32>
    %66 = vector.shape_cast %65 : vector<1x256xf32> to vector<256xf32>
    %67 = vector.shape_cast %66 : vector<256xf32> to vector<1x256xf32>
    %68 = vector.broadcast %64 : vector<4x1xf32> to vector<4x256xf32>
    %69 = vector.broadcast %67 : vector<1x256xf32> to vector<4x256xf32>
    %70 = arith.mulf %68, %69 : vector<4x256xf32>
    %71 = arith.addf %61, %70 : vector<4x256xf32>
    %72 = vector.extract_strided_slice %2 {offsets = [0, 7], sizes = [4, 1], strides = [1, 1]} : vector<4x8xf32> to vector<4x1xf32>
    %73 = vector.shape_cast %72 : vector<4x1xf32> to vector<4xf32>
    %74 = vector.shape_cast %73 : vector<4xf32> to vector<4x1xf32>
    %75 = vector.extract_strided_slice %1 {offsets = [7, 0], sizes = [1, 256], strides = [1, 1]} : vector<8x256xf32> to vector<1x256xf32>
    %76 = vector.shape_cast %75 : vector<1x256xf32> to vector<256xf32>
    %77 = vector.shape_cast %76 : vector<256xf32> to vector<1x256xf32>
    %78 = vector.broadcast %74 : vector<4x1xf32> to vector<4x256xf32>
    %79 = vector.broadcast %77 : vector<1x256xf32> to vector<4x256xf32>
    %80 = arith.mulf %78, %79 : vector<4x256xf32>
    %81 = arith.addf %71, %80 : vector<4x256xf32>
    %c0_4 = arith.constant 0 : index
    %c0_5 = arith.constant 0 : index
    %82 = vector.load %arg4[%c0_4, %c0_5] : memref<4x1xf32, #tpu.memory_space<vmem>>, vector<4x1xf32>
    %83 = vector.broadcast %82 : vector<4x1xf32> to vector<4x256xf32>
    %84 = arith.addf %81, %83 : vector<4x256xf32>
    %c0_6 = arith.constant 0 : index
    %c0_7 = arith.constant 0 : index
    %c0_8 = arith.constant 0 : index
    %85 = vector.load %arg5[%c0_6, %c0_7, %c0_8] : memref<1x4x256xf32, #tpu.memory_space<vmem>>, vector<1x4x256xf32>
    %86 = vector.shape_cast %85 : vector<1x4x256xf32> to vector<4x256xf32>
    %87 = arith.addf %86, %84 : vector<4x256xf32>
    %cst = arith.constant 0.707106769 : f32
    %88 = vector.broadcast %cst : f32 to vector<4x256xf32>
    %89 = arith.mulf %87, %88 : vector<4x256xf32>
    %c0_9 = arith.constant 0 : index
    %c0_10 = arith.constant 0 : index
    %c0_11 = arith.constant 0 : index
    %90 = vector.load %arg6[%c0_9, %c0_10, %c0_11] : memref<1x4x256xf32, #tpu.memory_space<vmem>>, vector<1x4x256xf32>
    %91 = vector.shape_cast %90 : vector<1x4x256xf32> to vector<4x256xf32>
    %92 = vector.shape_cast %89 : vector<4x256xf32> to vector<1x4x256xf32>
    tpu.vector_store %arg6[%c0_9, %c0_10, %c0_11], %92 {strides = array<i32>} : memref<1x4x256xf32, #tpu.memory_space<vmem>>, vector<1x4x256xf32>,
    return
  }
  func.func @transform_0(%arg0: i32, %arg1: i32) -> (i32, i32, i32) {
    %c0_i32 = arith.constant 0 : i32
    %c0_i32_0 = arith.constant 0 : i32
    return %arg0, %c0_i32, %arg1 : i32, i32, i32
  }
  func.func @transform_1(%arg0: i32, %arg1: i32) -> (i32, i32) {
    %c0_i32 = arith.constant 0 : i32
    %c0_i32_0 = arith.constant 0 : i32
    %c0_i32_1 = arith.constant 0 : i32
    return %c0_i32, %c0_i32_0 : i32, i32
  }
  func.func @transform_2(%arg0: i32, %arg1: i32) -> (i32, i32) {
    %c0_i32 = arith.constant 0 : i32
    %c0_i32_0 = arith.constant 0 : i32
    %c0_i32_1 = arith.constant 0 : i32
    return %c0_i32, %c0_i32_0 : i32, i32
  }
  func.func @transform_3(%arg0: i32, %arg1: i32) -> (i32, i32, i32) {
    %c0_i32 = arith.constant 0 : i32
    %c0_i32_0 = arith.constant 0 : i32
    return %arg0, %c0_i32, %arg1 : i32, i32, i32
  }
  func.func @transform_4(%arg0: i32, %arg1: i32) -> (i32, i32, i32) {
    %c0_i32 = arith.constant 0 : i32
    %c0_i32_0 = arith.constant 0 : i32
    return %arg0, %c0_i32, %arg1 : i32, i32, i32
  }
}

</mosaic_0001>

<llo_original>
// kernel: tpu_custom_call.1
$region0: #{tpu_custom_call.1}
  #allocation0 [shape = 'u32[]', space=smem, size = 0x4, offset = 0x4, fixed_abs, tag = 'smem constant byte address 0x4 - core index']
  #allocation1 [shape = 'u32[72,128]{1,0:T(1,128)}', space=vmem, size = 0x9000, scoped, tag = 'internal scratch']
  %s0 = inlined_call_operand.hbm [shape: f32[2,8,256], index: 0, kind: input, shape index: {}]
  %s1 = inlined_call_operand.vmem [shape: f32[4,8], index: 1, kind: input, shape index: {}]
  %s2 = inlined_call_operand.vmem [shape: f32[4,1], index: 2, kind: input, shape index: {}]
  %s3 = inlined_call_operand.hbm [shape: f32[2,4,320], index: 3, kind: input, shape index: {}]
  %s4 = inlined_call_operand.hbm [shape: f32[2,4,256], index: 4, kind: output, shape index: {}]
  %s5 = sld [smem:[#allocation0]]
  $region57: #{tpu_custom_call.1} parent=0
    _
  %s7 = ssub.s32 1, %s5
  %s8 = scalar_select 0, %s7, %s5
  $region1: #{tpu_custom_call.1} parent=0
    #allocation2 [shape = 'u8[16384]{0}', space=vmem, size = 0x4000, scoped, tag = 'input window, operand 0']
    #allocation3 [shape = 's32[2]{0}', space=sflag, size = 0x8, scoped, tag = 'scoped memory for tpu_custom_call.1']
    #allocation4 [shape = 's32[2]{0}', space=sflag, size = 0x8, scoped, tag = 'scoped memory for tpu_custom_call.1']
    #allocation5 [shape = 'u8[8192]{0}', space=vmem, size = 0x2000, scoped, tag = 'input window, operand 3']
    #allocation6 [shape = 's32[2]{0}', space=sflag, size = 0x8, scoped, tag = 'scoped memory for tpu_custom_call.1']
    #allocation7 [shape = 'u8[8192]{0}', space=vmem, size = 0x2000, scoped, tag = 'output window, operand 0']
    %9 = vsyncpa [#allocation3], 0
    %s10 = scalar_lea.sflag [#allocation3], 1
    %11 = vsyncpa %s10, 0
    %12 = vsyncpa [#allocation6], 0
    %s13 = scalar_lea.sflag [#allocation6], 1
    %14 = vsyncpa %s13, 0
    %15 = vsyncpa [#allocation4], 0
    %s16 = scalar_lea.sflag [#allocation4], 1
    %17 = vsyncpa %s16, 0
    loop: start=0, step=1, limit=4
    $region2: #{tpu_custom_call.1} parent=1 // loop_pre_header
      _
    $region3: #{tpu_custom_call.1} parent=1 // loop_header
      %s19 = sphi 0, %s23
      %p20 = scmp.ge.s32.totalorder %s19, 4
      %s26 = sphi 0, %s38
      %s27 = sphi 0, %s34
      %s28 = sphi 0, %s26
      %s29 = sphi 0, %s27
      %s30 = sphi 0, %s28
      %s31 = sphi 0, %s29
      %s43 = sphi 0, %s45
      %s46 = sphi 0, %s43
      %s47 = sphi 0, %s46
      %s63 = sphi 0, %s47
      %s67 = sphi 0, %s67
      %s69 = sphi 0, %s67
      %s70 = sphi 0, %s69
      %s84 = sphi 0, %s70
      %s88 = sphi 0, %s88
      %s90 = sphi 0, %s88
      %s91 = sphi 0, %s90
      %s105 = sphi 0, %s91
      %s113 = sphi 0, %s115
      %s116 = sphi 0, %s113
      %s117 = sphi 0, %s116
      %s133 = sphi 0, %s117
      %s141 = sphi 0, %s143
      %s144 = sphi 0, %s141
      %s145 = sphi 0, %s144
      %s161 = sphi 0, %s145
    $region4: #{tpu_custom_call.1} parent=1 // loop_header_branch
      %22 = sbr.rel (%p20) target = $region8
    $region5: #{tpu_custom_call.1} parent=1 // loop_body
      %s24 = ssub.s32 %s19, 1
      %s25 = ssub.s32 %s19, 2
      %s32 = sadd.s32 1, %s27
      %p33 = scmp.ge.s32.totalorder %s32, 1
      %s34 = scalar_select %p33, 0, %s32
      %s35 = sadd.s32 1, %s26
      %s36 = scalar_select %p33, %s35, %s26
      %p37 = scmp.ge.s32.totalorder %s36, 2
      %s38 = scalar_select %p37, 0, %s36
      %s39 = ssub.s32 %s26, %s38
      %s40 = ssub.s32 %s27, %s34
      %s41 = sor.u32 %s39, %s40
      %p42 = scmp.eq.s32.totalorder %s41, 0
      %s44 = sadd.s32 %s43, 1
      %s45 = scalar_select %p42, %s43, %s44
      %p48 = pneg %p42
      %p49 = scmp.eq.s32.totalorder %s19, 1
      %p50 = por %p48, %p49
      %p51 = scmp.ne.s32.totalorder %s43, %s46
      %p52 = scmp.eq.s32.totalorder %s19, 0
      %p53 = por %p51, %p52
      %p54 = scmp.ne.s32.totalorder %s43, %s46
      %p55 = scmp.eq.s32.totalorder %s24, 1
      %p56 = por %p54, %p55
      %p57 = scmp.ne.s32.totalorder %s46, %s47
      %p58 = scmp.eq.s32.totalorder %s24, 0
      %p59 = por %p57, %p58
      %p60 = scmp.ne.s32.totalorder %s46, %s47
      %p61 = scmp.eq.s32.totalorder %s25, 1
      %p62 = por %p60, %p61
      %p64 = scmp.ne.s32.totalorder %s47, %s63
      %p65 = scmp.eq.s32.totalorder %s25, 0
      %p66 = por %p64, %p65
      %s68 = sadd.s32 %s67, 1
      %p71 = scmp.eq.s32.totalorder %s19, 1
      %p72 = scmp.ne.s32.totalorder %s67, %s69
      %p73 = scmp.eq.s32.totalorder %s19, 0
      %p74 = por %p72, %p73
      %p75 = scmp.ne.s32.totalorder %s67, %s69
      %p76 = scmp.eq.s32.totalorder %s24, 1
      %p77 = por %p75, %p76
      %p78 = scmp.ne.s32.totalorder %s69, %s70
      %p79 = scmp.eq.s32.totalorder %s24, 0
      %p80 = por %p78, %p79
      %p81 = scmp.ne.s32.totalorder %s69, %s70
      %p82 = scmp.eq.s32.totalorder %s25, 1
      %p83 = por %p81, %p82
      %p85 = scmp.ne.s32.totalorder %s70, %s84
      %p86 = scmp.eq.s32.totalorder %s25, 0
      %p87 = por %p85, %p86
      %s89 = sadd.s32 %s88, 1
      %p92 = scmp.eq.s32.totalorder %s19, 1
      %p93 = scmp.ne.s32.totalorder %s88, %s90
      %p94 = scmp.eq.s32.totalorder %s19, 0
      %p95 = por %p93, %p94
      %p96 = scmp.ne.s32.totalorder %s88, %s90
      %p97 = scmp.eq.s32.totalorder %s24, 1
      %p98 = por %p96, %p97
      %p99 = scmp.ne.s32.totalorder %s90, %s91
      %p100 = scmp.eq.s32.totalorder %s24, 0
      %p101 = por %p99, %p100
      %p102 = scmp.ne.s32.totalorder %s90, %s91
      %p103 = scmp.eq.s32.totalorder %s25, 1
      %p104 = por %p102, %p103
      %p106 = scmp.ne.s32.totalorder %s91, %s105
      %p107 = scmp.eq.s32.totalorder %s25, 0
      %p108 = por %p106, %p107
      %s109 = ssub.s32 %s26, %s38
      %s110 = ssub.s32 %s27, %s34
      %s111 = sor.u32 %s109, %s110
      %p112 = scmp.eq.s32.totalorder %s111, 0
      %s114 = sadd.s32 %s113, 1
      %s115 = scalar_select %p112, %s113, %s114
      %p118 = pneg %p112
      %p119 = scmp.eq.s32.totalorder %s19, 1
      %p120 = por %p118, %p119
      %p121 = scmp.ne.s32.totalorder %s113, %s116
      %p122 = scmp.eq.s32.totalorder %s19, 0
      %p123 = por %p121, %p122
      %p124 = scmp.ne.s32.totalorder %s113, %s116
      %p125 = scmp.eq.s32.totalorder %s24, 1
      %p126 = por %p124, %p125
      %p127 = scmp.ne.s32.totalorder %s116, %s117
      %p128 = scmp.eq.s32.totalorder %s24, 0
      %p129 = por %p127, %p128
      %p130 = scmp.ne.s32.totalorder %s116, %s117
      %p131 = scmp.eq.s32.totalorder %s25, 1
      %p132 = por %p130, %p131
      %p134 = scmp.ne.s32.totalorder %s117, %s133
      %p135 = scmp.eq.s32.totalorder %s25, 0
      %p136 = por %p134, %p135
      %s137 = ssub.s32 %s26, %s38
      %s138 = ssub.s32 %s27, %s34
      %s139 = sor.u32 %s137, %s138
      %p140 = scmp.eq.s32.totalorder %s139, 0
      %s142 = sadd.s32 %s141, 1
      %s143 = scalar_select %p140, %s141, %s142
      %p146 = pneg %p140
      %p147 = scmp.eq.s32.totalorder %s19, 1
      %p148 = por %p146, %p147
      %p149 = scmp.ne.s32.totalorder %s141, %s144
      %p150 = scmp.eq.s32.totalorder %s19, 0
      %p151 = por %p149, %p150
      %p152 = scmp.ne.s32.totalorder %s141, %s144
      %p153 = scmp.eq.s32.totalorder %s24, 1
      %p154 = por %p152, %p153
      %p155 = scmp.ne.s32.totalorder %s144, %s145
      %p156 = scmp.eq.s32.totalorder %s24, 0
      %p157 = por %p155, %p156
      %p158 = scmp.ne.s32.totalorder %s144, %s145
      %p159 = scmp.eq.s32.totalorder %s25, 1
      %p160 = por %p158, %p159
      %p162 = scmp.ne.s32.totalorder %s145, %s161
      %p163 = scmp.eq.s32.totalorder %s25, 0
      %p164 = por %p162, %p163
      %p165 = scmp.le.s32.totalorder 1, %s19
      %p166 = scmp.lt.s32.totalorder %s19, 3
      %p167 = pnand %p165, %p166
      %p168 = pneg %p167
      // Predicated region
      $region9: #{tpu_custom_call.1} parent=5 // pred_check
        _
      $region10: #{tpu_custom_call.1} parent=5 // pred_check_branch
        %170 = sbr.rel (%p167) target = $region12
      $region11: #{tpu_custom_call.1} parent=5 // pred_region
        %s171 = ssub.s32 %s19, 1
        // Predicated region
        $region13: #{tpu_custom_call.1} parent=11 // pred_check
          %p172 = pneg %p80
        $region14: #{tpu_custom_call.1} parent=11 // pred_check_branch
          %174 = sbr.rel (%p172) target = $region16
        $region15: #{tpu_custom_call.1} parent=11 // pred_region
          _
        $region16: #{tpu_custom_call.1} parent=11 // pred_fallthru
          _
        // Predicated region
        $region17: #{tpu_custom_call.1} parent=11 // pred_check
          %p175 = pneg %p101
        $region18: #{tpu_custom_call.1} parent=11 // pred_check_branch
          %177 = sbr.rel (%p175) target = $region20
        $region19: #{tpu_custom_call.1} parent=11 // pred_region
          _
        $region20: #{tpu_custom_call.1} parent=11 // pred_fallthru
          _
      $region12: #{tpu_custom_call.1} parent=5 // pred_fallthru
        _
      %p178 = scmp.lt.s32.totalorder %s19, 2
      // Predicated region
      $region21: #{tpu_custom_call.1} parent=5 // pred_check
        %p179 = pneg %p178
      $region22: #{tpu_custom_call.1} parent=5 // pred_check_branch
        %181 = sbr.rel (%p179) target = $region24
      $region23: #{tpu_custom_call.1} parent=5 // pred_region
        // Predicated region
        $region25: #{tpu_custom_call.1} parent=23 // pred_check
          %p182 = pneg %p53
        $region26: #{tpu_custom_call.1} parent=23 // pred_check_branch
          %184 = sbr.rel (%p182) target = $region28
        $region27: #{tpu_custom_call.1} parent=23 // pred_region
          %s185 = sand.u32 %s43, 1
          %s186 = scalar_lea.sflag [#allocation3], %s185
          %s187 = sand.u32 %s43, 1
          %s188 = smul.addr %s187, 16
          %s189 = scalar_lea.vmem [#allocation2], %s188
          %s190 = smul.u32 2, %s27
          %192 = vsyncadd %s186, 0
          %s193 = smul.addr %s26, 2
          %s194 = sadd.s32 %s190, %s193
          %s195 = smul.addr %s194, 8
          %s196 = scalar_lea.hbm %s0, %s195
          %s198 = sshll.u32 %s196, 4
          %s199 = int_to_ptr.hbm [resolvable:$true] %s198
          %s200 = sshll.u32 %s189, 4
          %s201 = int_to_ptr.vmem [resolvable:$true] %s200
          %203 = dma.hbm_to_vmem [thread:$0]  %s199, 256, %s201, %s186
        $region28: #{tpu_custom_call.1} parent=23 // pred_fallthru
          _
        // Predicated region
        $region29: #{tpu_custom_call.1} parent=23 // pred_check
          %p204 = pneg %p123
        $region30: #{tpu_custom_call.1} parent=23 // pred_check_branch
          %206 = sbr.rel (%p204) target = $region32
        $region31: #{tpu_custom_call.1} parent=23 // pred_region
          %s207 = sand.u32 %s113, 1
          %s208 = scalar_lea.sflag [#allocation6], %s207
          %s209 = sand.u32 %s113, 1
          %s210 = smul.addr %s209, 8
          %s211 = scalar_lea.vmem [#allocation5], %s210
          %s212 = smul.u32 2, %s27
          %s213 = ssub.s32 3, %s212
          %p214 = scmp.lt.s32.totalorder %s213, 2
          %s215 = scalar_select %p214, %s213, 2
          %s216 = smul.u32 4, %s215
          %s217 = ssub.s32 8, %s216
          %s218 = sshll.u32 %s217, 4
          %219 = vsyncadd %s208, %s218
          %p220 = scmp.ne.s32.totalorder 0, %s216
          %s221 = smul.addr %s26, 3
          %s222 = sadd.s32 %s212, %s221
          %s223 = smul.addr %s222, 4
          %s224 = scalar_lea.hbm %s3, %s223
          %s225 = smul.u32 %s215, 4
          %s226 = sshll.u32 %s225, 4
          %s227 = sshll.u32 %s224, 4
          %s228 = int_to_ptr.hbm [resolvable:$true] %s227
          %s229 = sshll.u32 %s211, 4
          %s230 = int_to_ptr.vmem [resolvable:$true] %s229
          %232 = dma.hbm_to_vmem [thread:$0]  (%p220), %s228, %s226, %s230, %s208
        $region32: #{tpu_custom_call.1} parent=23 // pred_fallthru
          _
      $region24: #{tpu_custom_call.1} parent=5 // pred_fallthru
        _
      %p233 = scmp.le.s32.totalorder 1, %s19
      %p234 = scmp.lt.s32.totalorder %s19, 3
      %p235 = pnand %p233, %p234
      %p236 = pneg %p235
      // Predicated region
      $region33: #{tpu_custom_call.1} parent=5 // pred_check
        _
      $region34: #{tpu_custom_call.1} parent=5 // pred_check_branch
        %238 = sbr.rel (%p235) target = $region36
      $region35: #{tpu_custom_call.1} parent=5 // pred_region
        %s239 = ssub.s32 %s19, 1
        %s240 = sand.u32 %s46, 1
        %s241 = scalar_lea.sflag [#allocation3], %s240
        %s242 = sand.u32 %s46, 1
        %s243 = smul.addr %s242, 16
        %s244 = scalar_lea.vmem [#allocation2], %s243
        // Predicated region
        $region37: #{tpu_custom_call.1} parent=35 // pred_check
          %p245 = pneg %p59
        $region38: #{tpu_custom_call.1} parent=35 // pred_check_branch
          %247 = sbr.rel (%p245) target = $region40
        $region39: #{tpu_custom_call.1} parent=35 // pred_region
          %249 = dma.done %s241, 256
        $region40: #{tpu_custom_call.1} parent=35 // pred_fallthru
          _
        %s250 = sand.u32 %s116, 1
        %s251 = scalar_lea.sflag [#allocation6], %s250
        %s252 = sand.u32 %s116, 1
        %s253 = smul.addr %s252, 8
        %s254 = scalar_lea.vmem [#allocation5], %s253
        // Predicated region
        $region41: #{tpu_custom_call.1} parent=35 // pred_check
          %p255 = pneg %p129
        $region42: #{tpu_custom_call.1} parent=35 // pred_check_branch
          %257 = sbr.rel (%p255) target = $region44
        $region43: #{tpu_custom_call.1} parent=35 // pred_region
          %259 = dma.done %s251, 128
        $region44: #{tpu_custom_call.1} parent=35 // pred_fallthru
          _
        %s260 = sand.u32 %s46, 1
        %s261 = scalar_lea.sflag [#allocation3], %s260
        %s262 = sand.u32 %s46, 1
        %s263 = smul.addr %s262, 16
        %s264 = scalar_lea.vmem [#allocation2], %s263
        %p265 = pneg %p59
        %p266 = pneg %p56
        %p267 = pneg %p80
        %p268 = pneg %p77
        %p269 = pneg %p101
        %p270 = pneg %p98
        %s271 = sand.u32 %s116, 1
        %s272 = scalar_lea.sflag [#allocation6], %s271
        %s273 = sand.u32 %s116, 1
        %s274 = smul.addr %s273, 8
        %s275 = scalar_lea.vmem [#allocation5], %s274
        %p276 = pneg %p129
        %p277 = pneg %p126
        %p278 = pneg %p157
        %p279 = pneg %p154
        %s280 = sand.u32 %s144, 1
        %s281 = scalar_lea.sflag [#allocation4], %s280
        %s282 = sand.u32 %s144, 1
        %s283 = smul.addr %s282, 8
        %s284 = scalar_lea.vmem [#allocation7], %s283
        %s285 = smul.u32 2, %s29
        %s286 = smul.u32 2, %s29
        %s287 = ssub.s32 3, %s286
        %p288 = scmp.lt.s32.totalorder %s287, 2
        %s289 = scalar_select %p288, %s287, 2
        %s290 = smul.u32 4, %s289
        %s291 = smul.u32 2, %s29
        %v292 = vld [vmem:[%s244] sm:$0xff]
        %v293 = vld [vmem:[%s244 + $0x8] sm:$0xff]
        %v294 = vld [vmem:[%s1] sm:$0xf]
        %296 = vset.pattern.permute.xlu0 0
        %297 = vperm.xlu0 %296, %v294
        %v298 = vpop.permute.xlu0 %297
        %v300 = vperm.slane %v292, 0
        %v301 = vperm.slane %v293, 0
        %v302 = vmul.f32 %v298, %v300
        %v303 = vmul.f32 %v298, %v301
        %304 = vset.pattern.permute.xlu0 1
        %305 = vperm.xlu0 %304, %v294
        %v306 = vpop.permute.xlu0 %305
        %v308 = vperm.slane %v292, 1
        %v309 = vperm.slane %v293, 1
        %v310 = vmul.f32 %v306, %v308
        %v311 = vmul.f32 %v306, %v309
        %v312 = vadd.f32 %v302, %v310
        %v313 = vadd.f32 %v303, %v311
        %314 = vset.pattern.permute.xlu0 2
        %315 = vperm.xlu0 %314, %v294
        %v316 = vpop.permute.xlu0 %315
        %v318 = vperm.slane %v292, 2
        %v319 = vperm.slane %v293, 2
        %v320 = vmul.f32 %v316, %v318
        %v321 = vmul.f32 %v316, %v319
        %v322 = vadd.f32 %v312, %v320
        %v323 = vadd.f32 %v313, %v321
        %324 = vset.pattern.permute.xlu0 3
        %325 = vperm.xlu0 %324, %v294
        %v326 = vpop.permute.xlu0 %325
        %v328 = vperm.slane %v292, 3
        %v329 = vperm.slane %v293, 3
        %v330 = vmul.f32 %v326, %v328
        %v331 = vmul.f32 %v326, %v329
        %v332 = vadd.f32 %v322, %v330
        %v333 = vadd.f32 %v323, %v331
        %334 = vset.pattern.permute.xlu0 4
        %335 = vperm.xlu0 %334, %v294
        %v336 = vpop.permute.xlu0 %335
        %v338 = vperm.slane %v292, 4
        %v339 = vperm.slane %v293, 4
        %v340 = vmul.f32 %v336, %v338
        %v341 = vmul.f32 %v336, %v339
        %v342 = vadd.f32 %v332, %v340
        %v343 = vadd.f32 %v333, %v341
        %344 = vset.pattern.permute.xlu0 5
        %345 = vperm.xlu0 %344, %v294
        %v346 = vpop.permute.xlu0 %345
        %v348 = vperm.slane %v292, 5
        %v349 = vperm.slane %v293, 5
        %v350 = vmul.f32 %v346, %v348
        %v351 = vmul.f32 %v346, %v349
        %v352 = vadd.f32 %v342, %v350
        %v353 = vadd.f32 %v343, %v351
        %354 = vset.pattern.permute.xlu0 6
        %355 = vperm.xlu0 %354, %v294
        %v356 = vpop.permute.xlu0 %355
        %v358 = vperm.slane %v292, 6
        %v359 = vperm.slane %v293, 6
        %v360 = vmul.f32 %v356, %v358
        %v361 = vmul.f32 %v356, %v359
        %v362 = vadd.f32 %v352, %v360
        %v363 = vadd.f32 %v353, %v361
        %364 = vset.pattern.permute.xlu0 7
        %365 = vperm.xlu0 %364, %v294
        %v366 = vpop.permute.xlu0 %365
        %v368 = vperm.slane %v292, 7
        %v369 = vperm.slane %v293, 7
        %v370 = vmul.f32 %v366, %v368
        %v371 = vmul.f32 %v366, %v369
        %v372 = vadd.f32 %v362, %v370
        %v373 = vadd.f32 %v363, %v371
        %v374 = vld [vmem:[%s2] sm:$0xf]
        %376 = vset.pattern.permute.xlu0 0
        %377 = vperm.xlu0 %376, %v374
        %v378 = vpop.permute.xlu0 %377
        %v380 = vadd.f32 %v372, %v378
        %v381 = vadd.f32 %v373, %v378
        %v382 = vld [vmem:[%s254] sm:$0xff]
        %v385 = vrot.slane %v381, 4
        %vm386 = vcmask 1043456
        %v387 = vsel %vm386, %v380, %v385
        %v389 = vadd.f32 %v382, %v387
        %v390 = vmul.f32 %v389, 0.70710677
        %391 = vst [vmem:[%s284] sm:$0xff] %v390
        %s392 = sand.u32 %s144, 1
        %s393 = scalar_lea.sflag [#allocation4], %s392
        %s394 = sand.u32 %s144, 1
        %s395 = smul.addr %s394, 8
        %s396 = scalar_lea.vmem [#allocation7], %s395
        // Predicated region
        $region45: #{tpu_custom_call.1} parent=35 // pred_check
          %p397 = pneg %p154
        $region46: #{tpu_custom_call.1} parent=35 // pred_check_branch
          %399 = sbr.rel (%p397) target = $region48
        $region47: #{tpu_custom_call.1} parent=35 // pred_region
          %s400 = smul.u32 2, %s29
          %402 = vsyncadd %s393, 0
          %s403 = smul.addr %s28, 2
          %s404 = sadd.s32 %s400, %s403
          %s405 = smul.addr %s404, 4
          %s406 = scalar_lea.hbm %s4, %s405
          %s408 = sshll.u32 %s396, 4
          %s409 = int_to_ptr.vmem [resolvable:$true] %s408
          %s410 = sshll.u32 %s406, 4
          %s411 = int_to_ptr.hbm [resolvable:$true] %s410
          %413 = dma.vmem_to_hbm [thread:$0]  %s409, 128, %s411, %s393
        $region48: #{tpu_custom_call.1} parent=35 // pred_fallthru
          _
      $region36: #{tpu_custom_call.1} parent=5 // pred_fallthru
        _
      %p414 = scmp.le.s32.totalorder 2, %s19
      // Predicated region
      $region49: #{tpu_custom_call.1} parent=5 // pred_check
        %p415 = pneg %p414
      $region50: #{tpu_custom_call.1} parent=5 // pred_check_branch
        %417 = sbr.rel (%p415) target = $region52
      $region51: #{tpu_custom_call.1} parent=5 // pred_region
        %s418 = ssub.s32 %s19, 2
        // Predicated region
        $region53: #{tpu_custom_call.1} parent=51 // pred_check
          %p419 = pneg %p160
        $region54: #{tpu_custom_call.1} parent=51 // pred_check_branch
          %421 = sbr.rel (%p419) target = $region56
        $region55: #{tpu_custom_call.1} parent=51 // pred_region
          %s422 = sand.u32 %s145, 1
          %s423 = scalar_lea.sflag [#allocation4], %s422
          %s424 = sand.u32 %s145, 1
          %s425 = smul.addr %s424, 8
          %s426 = scalar_lea.vmem [#allocation7], %s425
          %428 = dma.done %s423, 128
        $region56: #{tpu_custom_call.1} parent=51 // pred_fallthru
          _
      $region52: #{tpu_custom_call.1} parent=5 // pred_fallthru
        _
    $region6: #{tpu_custom_call.1} parent=1 // loop_footer
      %s23 = sadd.s32 1, %s19
    $region7: #{tpu_custom_call.1} parent=1 // loop_footer_branch
      %18 = sbr.rel target = $region3
    $region8: #{tpu_custom_call.1} parent=1 // loop_exit
      _
    %429 = vsyncpa [#allocation3], 1
    %s430 = scalar_lea.sflag [#allocation3], 1
    %431 = vsyncpa %s430, 1
    %432 = vsyncpa [#allocation6], 1
    %s433 = scalar_lea.sflag [#allocation6], 1
    %434 = vsyncpa %s433, 1
    %435 = vsyncpa [#allocation4], 1
    %s436 = scalar_lea.sflag [#allocation4], 1
    %437 = vsyncpa %s436, 1

</llo_original>
